<compile_context>
chip_gen: v7x
topology: tpu7x:2x2x1
jax: 0.10.0
libtpu: 0.0.40
codegen_flags: <defaults>
</compile_context>

<pallas_src>
import jax
import jax.numpy as jnp
from jax.experimental import pallas as pl
from jax.experimental.pallas import tpu as pltpu


def gcn_net_kernel(a_ref, x_ref,
                   w1_ref, b1_ref,
                   w2_ref, b2_ref,
                   w3_ref, b3_ref,
                   o_ref):
    """Fused 3-layer GCN for the whole (flattened) batch; all operands live in VMEM."""
    bf16 = jnp.bfloat16
    f32 = jnp.float32

    a = a_ref[...]          # [BN, BN]   bf16 block-diagonal normalized adjacency
    x = x_ref[...]          # [BN, F_in] bf16 node features

    # ---- GCNConv 1 + ReLU ----------------------------------------------------
    # Re-associated: (A @ X) @ W1 -> the BN^2 propagation runs at width F_in < hidden.
    ax = jnp.dot(a, x, preferred_element_type=f32)                               # [BN, F_in]
    h = jnp.dot(ax.astype(bf16), w1_ref[...], preferred_element_type=f32)        # [BN, H]
    h = h + b1_ref[...]
    h = jnp.maximum(h, 0.0)                                                       # ReLU in f32
    # dropout (p=0.5) -> identity in eval mode

    # ---- GCNConv 2 + ReLU ----------------------------------------------------
    hw = jnp.dot(h.astype(bf16), w2_ref[...], preferred_element_type=f32)        # [BN, H]
    h = jnp.dot(a, hw.astype(bf16), preferred_element_type=f32) + b2_ref[...]    # [BN, H]
    h = jnp.maximum(h, 0.0)
    # dropout (p=0.5) -> identity in eval mode

    # ---- GCNConv 3 (lane-padded to 128 output columns) -------------------------
    # Re-associated: (A @ H) @ W3pad -> propagate at width H, not the padded 128.
    ah = jnp.dot(a, h.astype(bf16), preferred_element_type=f32)                  # [BN, H]
    logits = jnp.dot(ah.astype(bf16), w3_ref[...], preferred_element_type=f32)   # [BN, 128]
    logits = logits + b3_ref[...]        # padded lanes carry bias -1e30 -> exp() == 0

    # ---- softmax over the class axis -------------------------------------------
    m = jnp.max(logits, axis=1, keepdims=True)
    e = jnp.exp(logits - m)
    s = jnp.sum(e, axis=1, keepdims=True)
    o_ref[...] = e * pl.reciprocal(s, approx=True)   # EUP reciprocal, dense 128-lane store


def gcn_net_forward(a_hat, x, params):
    """Pallas wrapper.

    a_hat:  [B, N, N] symmetrically-normalized dense adjacency (f32)
    x:      [B, N, F_in] node features (f32)
    params: (w1, b1, w2, b2, w3, b3) in f32, unpadded
    returns [B, N, C] softmax probabilities (f32)
    """
    w1, b1, w2, b2, w3, b3 = params
    B, N, F_in = x.shape
    H = w1.shape[1]
    C = w3.shape[1]
    C_PAD = 128          # lane-dense final-layer width / output slab width
    BN = B * N

    # Block-diagonal batched adjacency: one [BN, BN] bf16 matmul per propagation replaces
    # B tiny [N, N] matmuls (full-height MXU passes, single grid step).
    a_blk = jnp.zeros((B, B, N, N), a_hat.dtype)
    a_blk = a_blk.at[jnp.arange(B), jnp.arange(B)].set(a_hat)
    a_big = a_blk.transpose(0, 2, 1, 3).reshape(BN, BN).astype(jnp.bfloat16)

    # bf16 matmul operands; accumulation stays f32 inside the kernel.
    x_flat = x.reshape(BN, F_in).astype(jnp.bfloat16)
    w1_bf = w1.astype(jnp.bfloat16)
    w2_bf = w2.astype(jnp.bfloat16)
    # Pad final layer to 128 lanes: zero weight columns + -1e30 bias columns so the in-kernel
    # 128-lane softmax is exactly the softmax over the real C classes.
    w3_pad = jnp.zeros((H, C_PAD), jnp.float32).at[:, :C].set(w3).astype(jnp.bfloat16)
    b3_pad = jnp.full((1, C_PAD), -1e30, jnp.float32).at[:, :C].set(b3)

    vmem = pl.BlockSpec(memory_space=pltpu.MemorySpace.VMEM)

    out_padded = pl.pallas_call(
        gcn_net_kernel,
        out_shape=jax.ShapeDtypeStruct((BN, C_PAD), jnp.float32),
        in_specs=[vmem] * 8,
        out_specs=vmem,
    )(a_big, x_flat, w1_bf, b1, w2_bf, b2, w3_pad, b3_pad)

    return out_padded.reshape(B, N, C_PAD)[:, :, :C]


def gcn_net_reference(a_hat, x, params):
    """Pure-JAX f32 reference (same association order as the kernel)."""
    w1, b1, w2, b2, w3, b3 = params
    h = jnp.einsum('bij,bjf->bif', a_hat, x) @ w1 + b1
    h = jax.nn.relu(h)
    h = jnp.einsum('bij,bjf->bif', a_hat, h @ w2) + b2
    h = jax.nn.relu(h)
    logits = jnp.einsum('bij,bjf->bif', a_hat, h) @ w3 + b3
    return jax.nn.softmax(logits, axis=-1)


def build_batched_normalized_adjacency(key, batch, num_nodes, p_edge=0.25):
    """Dense D^-1/2 (A + I) D^-1/2 for a batch of deterministic random undirected graphs."""
    u = jax.random.uniform(key, (batch, num_nodes, num_nodes))
    upper = jnp.triu((u < p_edge).astype(jnp.float32), k=1)
    A = upper + jnp.transpose(upper, (0, 2, 1))              # symmetric, zero diagonal
    A_tilde = A + jnp.eye(num_nodes, dtype=jnp.float32)      # add self-loops
    deg = A_tilde.sum(axis=-1)
    d_inv_sqrt = 1.0 / jnp.sqrt(deg)
    return d_inv_sqrt[:, :, None] * A_tilde * d_inv_sqrt[:, None, :]


def init_params(key, num_nodes, hidden_channels, num_classes):
    """Deterministic glorot-style weights + zero biases (GCNConv: W [in,out], b [out])."""
    k1, k2, k3 = jax.random.split(key, 3)

    def glorot(k, fan_in, fan_out):
        scale = jnp.sqrt(6.0 / (fan_in + fan_out))
        return jax.random.uniform(k, (fan_in, fan_out), jnp.float32, -scale, scale)

    w1 = glorot(k1, num_nodes, hidden_channels)
    w2 = glorot(k2, hidden_channels, hidden_channels)
    w3 = glorot(k3, hidden_channels, num_classes)
    # biases kept 2-D [1, out] for clean VMEM layout / broadcasting inside the kernel
    b1 = jnp.zeros((1, hidden_channels), jnp.float32)
    b2 = jnp.zeros((1, hidden_channels), jnp.float32)
    b3 = jnp.zeros((1, num_classes), jnp.float32)
    return w1, b1, w2, b2, w3, b3


if __name__ == "__main__":
    batch = 8
    num_nodes = 16          # -> B*N = 128 flattened node rows (one full MXU pass height)
    hidden_channels = 36
    num_classes = 4

    key = jax.random.PRNGKey(0)
    k_x, k_a, k_p = jax.random.split(key, 3)

    # Node features: GCNConv(num_nodes, hidden) => each node has num_nodes input features.
    x = jax.random.normal(k_x, (batch, num_nodes, num_nodes), jnp.float32)

    # Batch of deterministic random undirected graphs -> dense normalized adjacency.
    a_hat = build_batched_normalized_adjacency(k_a, batch, num_nodes, p_edge=0.25)

    params = init_params(k_p, num_nodes, hidden_channels, num_classes)

    out = gcn_net_forward(a_hat, x, params)
    out = jax.block_until_ready(out)

    # correctness checks
    assert out.shape == (batch, num_nodes, num_classes)
    # softmax rows sum to 1 (approx reciprocal -> small tolerance)
    assert bool(jnp.allclose(out.sum(axis=-1), 1.0, atol=1e-2))
    # match pure-JAX f32 reference within bf16-matmul tolerance
    ref = gcn_net_reference(a_hat, x, params)
    assert bool(jnp.allclose(out, ref, atol=5e-2, rtol=5e-2))

    print("KERNEL_OK")
</pallas_src>

<mosaic_0001>
module attributes {stable_mosaic.version = 11 : i64} {
  func.func @gcn_net_kernel(%arg0: memref<128x128xbf16, #tpu.memory_space<vmem>>, %arg1: memref<128x16xbf16, #tpu.memory_space<vmem>>, %arg2: memref<16x36xbf16, #tpu.memory_space<vmem>>, %arg3: memref<1x36xf32, #tpu.memory_space<vmem>>, %arg4: memref<36x36xbf16, #tpu.memory_space<vmem>>, %arg5: memref<1x36xf32, #tpu.memory_space<vmem>>, %arg6: memref<36x128xbf16, #tpu.memory_space<vmem>>, %arg7: memref<1x128xf32, #tpu.memory_space<vmem>>, %arg8: memref<128x128xf32, #tpu.memory_space<vmem>>) attributes {dimension_semantics = [], scalar_prefetch = 0 : i64, scratch_operands = 0 : i64, tpu.core_type = #tpu.core_type<tc>} {
    %c0 = arith.constant 0 : index
    %c0_0 = arith.constant 0 : index
    %0 = vector.load %arg0[%c0, %c0_0] : memref<128x128xbf16, #tpu.memory_space<vmem>>, vector<128x128xbf16>
    %c0_1 = arith.constant 0 : index
    %c0_2 = arith.constant 0 : index
    %1 = vector.load %arg1[%c0_1, %c0_2] : memref<128x16xbf16, #tpu.memory_space<vmem>>, vector<128x16xbf16>
    %cst = arith.constant dense<0.000000e+00> : vector<128x16xf32>
    %2 = tpu.matmul %0, %1, %cst {dimension_numbers = #tpu.dot_dimension_numbers<[1], [0], [0], [1], [0, 0, 1, 1], [], []>} : vector<128x128xbf16>, vector<128x16xbf16>, vector<128x16xf32> -> vector<128x16xf32>
    %3 = arith.truncf %2 : vector<128x16xf32> to vector<128x16xbf16>
    %c0_3 = arith.constant 0 : index
    %c0_4 = arith.constant 0 : index
    %4 = vector.load %arg2[%c0_3, %c0_4] : memref<16x36xbf16, #tpu.memory_space<vmem>>, vector<16x36xbf16>
    %cst_5 = arith.constant dense<0.000000e+00> : vector<128x36xf32>
    %5 = tpu.matmul %3, %4, %cst_5 {dimension_numbers = #tpu.dot_dimension_numbers<[1], [0], [0], [1], [0, 0, 1, 1], [], []>} : vector<128x16xbf16>, vector<16x36xbf16>, vector<128x36xf32> -> vector<128x36xf32>
    %c0_6 = arith.constant 0 : index
    %c0_7 = arith.constant 0 : index
    %6 = vector.load %arg3[%c0_6, %c0_7] : memref<1x36xf32, #tpu.memory_space<vmem>>, vector<1x36xf32>
    %7 = vector.broadcast %6 : vector<1x36xf32> to vector<128x36xf32>
    %8 = arith.addf %5, %7 : vector<128x36xf32>
    %cst_8 = arith.constant 0.000000e+00 : f32
    %9 = vector.broadcast %cst_8 : f32 to vector<128x36xf32>
    %10 = arith.maximumf %8, %9 : vector<128x36xf32>
    %11 = arith.truncf %10 : vector<128x36xf32> to vector<128x36xbf16>
    %c0_9 = arith.constant 0 : index
    %c0_10 = arith.constant 0 : index
    %12 = vector.load %arg4[%c0_9, %c0_10] : memref<36x36xbf16, #tpu.memory_space<vmem>>, vector<36x36xbf16>
    %cst_11 = arith.constant dense<0.000000e+00> : vector<128x36xf32>
    %13 = tpu.matmul %11, %12, %cst_11 {dimension_numbers = #tpu.dot_dimension_numbers<[1], [0], [0], [1], [0, 0, 1, 1], [], []>} : vector<128x36xbf16>, vector<36x36xbf16>, vector<128x36xf32> -> vector<128x36xf32>
    %14 = arith.truncf %13 : vector<128x36xf32> to vector<128x36xbf16>
    %cst_12 = arith.constant dense<0.000000e+00> : vector<128x36xf32>
    %15 = tpu.matmul %0, %14, %cst_12 {dimension_numbers = #tpu.dot_dimension_numbers<[1], [0], [0], [1], [0, 0, 1, 1], [], []>} : vector<128x128xbf16>, vector<128x36xbf16>, vector<128x36xf32> -> vector<128x36xf32>
    %c0_13 = arith.constant 0 : index
    %c0_14 = arith.constant 0 : index
    %16 = vector.load %arg5[%c0_13, %c0_14] : memref<1x36xf32, #tpu.memory_space<vmem>>, vector<1x36xf32>
    %17 = vector.broadcast %16 : vector<1x36xf32> to vector<128x36xf32>
    %18 = arith.addf %15, %17 : vector<128x36xf32>
    %cst_15 = arith.constant 0.000000e+00 : f32
    %19 = vector.broadcast %cst_15 : f32 to vector<128x36xf32>
    %20 = arith.maximumf %18, %19 : vector<128x36xf32>
    %21 = arith.truncf %20 : vector<128x36xf32> to vector<128x36xbf16>
    %cst_16 = arith.constant dense<0.000000e+00> : vector<128x36xf32>
    %22 = tpu.matmul %0, %21, %cst_16 {dimension_numbers = #tpu.dot_dimension_numbers<[1], [0], [0], [1], [0, 0, 1, 1], [], []>} : vector<128x128xbf16>, vector<128x36xbf16>, vector<128x36xf32> -> vector<128x36xf32>
    %23 = arith.truncf %22 : vector<128x36xf32> to vector<128x36xbf16>
    %c0_17 = arith.constant 0 : index
    %c0_18 = arith.constant 0 : index
    %24 = vector.load %arg6[%c0_17, %c0_18] : memref<36x128xbf16, #tpu.memory_space<vmem>>, vector<36x128xbf16>
    %cst_19 = arith.constant dense<0.000000e+00> : vector<128x128xf32>
    %25 = tpu.matmul %23, %24, %cst_19 {dimension_numbers = #tpu.dot_dimension_numbers<[1], [0], [0], [1], [0, 0, 1, 1], [], []>} : vector<128x36xbf16>, vector<36x128xbf16>, vector<128x128xf32> -> vector<128x128xf32>
    %c0_20 = arith.constant 0 : index
    %c0_21 = arith.constant 0 : index
    %26 = vector.load %arg7[%c0_20, %c0_21] : memref<1x128xf32, #tpu.memory_space<vmem>>, vector<1x128xf32>
    %27 = vector.broadcast %26 : vector<1x128xf32> to vector<128x128xf32>
    %28 = arith.addf %25, %27 : vector<128x128xf32>
    %cst_22 = arith.constant dense<0xFF800000> : vector<128xf32>
    %29 = vector.multi_reduction <maximumf>, %28, %cst_22 [1] : vector<128x128xf32> to vector<128xf32>
    %30 = vector.shape_cast %29 : vector<128xf32> to vector<128x1xf32>
    %31 = vector.broadcast %30 : vector<128x1xf32> to vector<128x128xf32>
    %32 = arith.subf %28, %31 : vector<128x128xf32>
    %33 = math.exp %32 : vector<128x128xf32>
    %cst_23 = arith.constant dense<0.000000e+00> : vector<128xf32>
    %34 = vector.multi_reduction <add>, %33, %cst_23 [1] : vector<128x128xf32> to vector<128xf32>
    %35 = vector.shape_cast %34 : vector<128xf32> to vector<128x1xf32>
    %36 = tpu.reciprocal %35 {approx = true} : vector<128x1xf32> -> vector<128x1xf32>
    %37 = vector.broadcast %36 : vector<128x1xf32> to vector<128x128xf32>
    %38 = arith.mulf %33, %37 : vector<128x128xf32>
    %c0_24 = arith.constant 0 : index
    %c0_25 = arith.constant 0 : index
    %39 = vector.load %arg8[%c0_24, %c0_25] : memref<128x128xf32, #tpu.memory_space<vmem>>, vector<128x128xf32>
    tpu.vector_store %arg8[%c0_24, %c0_25], %38 {strides = array<i32>} : memref<128x128xf32, #tpu.memory_space<vmem>>, vector<128x128xf32>,
    return
  }
}

</mosaic_0001>

<llo_original>
// kernel: tpu_custom_call.1
$region0: #{tpu_custom_call.1}
  #allocation0 [shape = 'u32[]', space=smem, size = 0x4, offset = 0x4, fixed_abs, tag = 'smem constant byte address 0x4 - core index']
  #allocation1 [shape = 'u32[144,128]{1,0:T(1,128)}', space=vmem, size = 0x12000, scoped, tag = 'internal scratch']
  %s0 = inlined_call_operand.vmem [shape: bf16[128,128], index: 0, kind: input, shape index: {}]
  %s1 = inlined_call_operand.vmem [shape: bf16[128,16], index: 1, kind: input, shape index: {}]
  %s2 = inlined_call_operand.hbm [shape: bf16[16,36], index: 2, kind: input, shape index: {}]
  %s3 = inlined_call_operand.vmem [shape: f32[1,36], index: 3, kind: input, shape index: {}]
  %s4 = inlined_call_operand.vmem [shape: bf16[36,36], index: 4, kind: input, shape index: {}]
  %s5 = inlined_call_operand.vmem [shape: f32[1,36], index: 5, kind: input, shape index: {}]
  %s6 = inlined_call_operand.hbm [shape: bf16[36,128], index: 6, kind: input, shape index: {}]
  %s7 = inlined_call_operand.vmem [shape: f32[1,128], index: 7, kind: input, shape index: {}]
  %s8 = inlined_call_operand.hbm [shape: f32[128,128], index: 8, kind: output, shape index: {}]
  %s9 = sld [smem:[#allocation0]]
  $region50: #{tpu_custom_call.1} parent=0
    _
  %s11 = ssub.s32 1, %s9
  %s12 = scalar_select 0, %s11, %s9
  $region1: #{tpu_custom_call.1} parent=0
    #allocation2 [shape = 'u8[4096]{0}', space=vmem, size = 0x1000, scoped, tag = 'input window, operand 2, single buffered']
    #allocation3 [shape = 's32[1]{0}', space=sflag, size = 0x4, scoped, tag = 'scoped memory for tpu_custom_call.1']
    #allocation4 [shape = 's32[1]{0}', space=sflag, size = 0x4, scoped, tag = 'scoped memory for tpu_custom_call.1']
    #allocation5 [shape = 'u8[10240]{0}', space=vmem, size = 0x2800, scoped, tag = 'input window, operand 6, single buffered']
    #allocation6 [shape = 's32[1]{0}', space=sflag, size = 0x4, scoped, tag = 'scoped memory for tpu_custom_call.1']
    #allocation7 [shape = 'u8[65536]{0}', space=vmem, size = 0x10000, scoped, tag = 'output window, operand 0, single buffered']
    %13 = vsyncpa [#allocation3], 0
    %14 = vsyncpa [#allocation6], 0
    %15 = vsyncpa [#allocation4], 0
    // Predicated region
    $region2: #{tpu_custom_call.1} parent=1 // pred_check
      _
    $region3: #{tpu_custom_call.1} parent=1 // pred_check_branch
      %17 = sbr.rel (0) target = $region5
    $region4: #{tpu_custom_call.1} parent=1 // pred_region
      _
    $region5: #{tpu_custom_call.1} parent=1 // pred_fallthru
      _
    // Predicated region
    $region6: #{tpu_custom_call.1} parent=1 // pred_check
      _
    $region7: #{tpu_custom_call.1} parent=1 // pred_check_branch
      %19 = sbr.rel (0) target = $region9
    $region8: #{tpu_custom_call.1} parent=1 // pred_region
      _
    $region9: #{tpu_custom_call.1} parent=1 // pred_fallthru
      _
    // Predicated region
    $region10: #{tpu_custom_call.1} parent=1 // pred_check
      _
    $region11: #{tpu_custom_call.1} parent=1 // pred_check_branch
      %21 = sbr.rel (0) target = $region13
    $region12: #{tpu_custom_call.1} parent=1 // pred_region
      %s23 = ssub.s32 128, 128
      %24 = vsyncadd [#allocation3], %s23
      %s25 = sshll.u32 [#allocation2], 4
      %s26 = int_to_ptr.vmem [resolvable:$true] %s25
      %31 = dma.hbm_to_vmem [thread:$0]  %s2, 128, %s26, [#allocation3], 64, 64, 4
    $region13: #{tpu_custom_call.1} parent=1 // pred_fallthru
      _
    // Predicated region
    $region14: #{tpu_custom_call.1} parent=1 // pred_check
      _
    $region15: #{tpu_custom_call.1} parent=1 // pred_check_branch
      %33 = sbr.rel (0) target = $region17
    $region16: #{tpu_custom_call.1} parent=1 // pred_region
      _
    $region17: #{tpu_custom_call.1} parent=1 // pred_fallthru
      _
    // Predicated region
    $region18: #{tpu_custom_call.1} parent=1 // pred_check
      _
    $region19: #{tpu_custom_call.1} parent=1 // pred_check_branch
      %35 = sbr.rel (0) target = $region21
    $region20: #{tpu_custom_call.1} parent=1 // pred_region
      _
    $region21: #{tpu_custom_call.1} parent=1 // pred_fallthru
      _
    // Predicated region
    $region22: #{tpu_custom_call.1} parent=1 // pred_check
      _
    $region23: #{tpu_custom_call.1} parent=1 // pred_check_branch
      %37 = sbr.rel (0) target = $region25
    $region24: #{tpu_custom_call.1} parent=1 // pred_region
      _
    $region25: #{tpu_custom_call.1} parent=1 // pred_fallthru
      _
    // Predicated region
    $region26: #{tpu_custom_call.1} parent=1 // pred_check
      _
    $region27: #{tpu_custom_call.1} parent=1 // pred_check_branch
      %39 = sbr.rel (0) target = $region29
    $region28: #{tpu_custom_call.1} parent=1 // pred_region
      %s41 = ssub.s32 320, 320
      %42 = vsyncadd [#allocation6], %s41
      %s43 = sshll.u32 [#allocation5], 4
      %s44 = int_to_ptr.vmem [resolvable:$true] %s43
      %49 = dma.hbm_to_vmem [thread:$0]  %s6, 320, %s44, [#allocation6], 64, 64, 4
    $region29: #{tpu_custom_call.1} parent=1 // pred_fallthru
      _
    // Predicated region
    $region30: #{tpu_custom_call.1} parent=1 // pred_check
      _
    $region31: #{tpu_custom_call.1} parent=1 // pred_check_branch
      %51 = sbr.rel (0) target = $region33
    $region32: #{tpu_custom_call.1} parent=1 // pred_region
      _
    $region33: #{tpu_custom_call.1} parent=1 // pred_fallthru
      _
    // Predicated region
    $region34: #{tpu_custom_call.1} parent=1 // pred_check
      _
    $region35: #{tpu_custom_call.1} parent=1 // pred_check_branch
      %53 = sbr.rel (0) target = $region37
    $region36: #{tpu_custom_call.1} parent=1 // pred_region
      %54 = dma.done [#allocation3], 128
    $region37: #{tpu_custom_call.1} parent=1 // pred_fallthru
      _
    // Predicated region
    $region38: #{tpu_custom_call.1} parent=1 // pred_check
      _
    $region39: #{tpu_custom_call.1} parent=1 // pred_check_branch
      %56 = sbr.rel (0) target = $region41
    $region40: #{tpu_custom_call.1} parent=1 // pred_region
      %57 = dma.done [#allocation6], 320
    $region41: #{tpu_custom_call.1} parent=1 // pred_fallthru
      _
    %v59 = vld [vmem:[%s0] sm:$0xf]
    %v60 = vld [vmem:[%s0 + $0x4] sm:$0xf]
    %v61 = vld [vmem:[%s0 + $0x8] sm:$0xf]
    %v62 = vld [vmem:[%s0 + $0xc] sm:$0xf]
    %v63 = vld [vmem:[%s0 + $0x10] sm:$0xf]
    %v64 = vld [vmem:[%s0 + $0x14] sm:$0xf]
    %v65 = vld [vmem:[%s0 + $0x18] sm:$0xf]
    %v66 = vld [vmem:[%s0 + $0x1c] sm:$0xf]
    %v67 = vld [vmem:[%s0 + $0x20] sm:$0xf]
    %v68 = vld [vmem:[%s0 + $0x24] sm:$0xf]
    %v69 = vld [vmem:[%s0 + $0x28] sm:$0xf]
    %v70 = vld [vmem:[%s0 + $0x2c] sm:$0xf]
    %v71 = vld [vmem:[%s0 + $0x30] sm:$0xf]
    %v72 = vld [vmem:[%s0 + $0x34] sm:$0xf]
    %v73 = vld [vmem:[%s0 + $0x38] sm:$0xf]
    %v74 = vld [vmem:[%s0 + $0x3c] sm:$0xf]
    %v75 = vld [vmem:[%s1] sm:$0xf]
    %v76 = vld [vmem:[%s1 + $0x4] sm:$0xf]
    %v77 = vld [vmem:[%s1 + $0x8] sm:$0xf]
    %v78 = vld [vmem:[%s1 + $0xc] sm:$0xf]
    %v79 = vld [vmem:[%s1 + $0x10] sm:$0xf]
    %v80 = vld [vmem:[%s1 + $0x14] sm:$0xf]
    %v81 = vld [vmem:[%s1 + $0x18] sm:$0xf]
    %v82 = vld [vmem:[%s1 + $0x1c] sm:$0xf]
    %v83 = vld [vmem:[%s1 + $0x20] sm:$0xf]
    %v84 = vld [vmem:[%s1 + $0x24] sm:$0xf]
    %v85 = vld [vmem:[%s1 + $0x28] sm:$0xf]
    %v86 = vld [vmem:[%s1 + $0x2c] sm:$0xf]
    %v87 = vld [vmem:[%s1 + $0x30] sm:$0xf]
    %v88 = vld [vmem:[%s1 + $0x34] sm:$0xf]
    %v89 = vld [vmem:[%s1 + $0x38] sm:$0xf]
    %v90 = vld [vmem:[%s1 + $0x3c] sm:$0xf]
    %v107 = vunpack.c.l.b16 %v59
    %v108 = vunpack.c.l.b16 %v60
    %v109 = vunpack.c.l.b16 %v61
    %v110 = vunpack.c.l.b16 %v62
    %v111 = vunpack.c.l.b16 %v63
    %v112 = vunpack.c.l.b16 %v64
    %v113 = vunpack.c.l.b16 %v65
    %v114 = vunpack.c.l.b16 %v66
    %v115 = vunpack.c.l.b16 %v67
    %v116 = vunpack.c.l.b16 %v68
    %v117 = vunpack.c.l.b16 %v69
    %v118 = vunpack.c.l.b16 %v70
    %v119 = vunpack.c.l.b16 %v71
    %v120 = vunpack.c.l.b16 %v72
    %v121 = vunpack.c.l.b16 %v73
    %v122 = vunpack.c.l.b16 %v74
    %v123 = vpack.c.b16 %v108, %v107
    %v124 = vpack.c.b16 %v110, %v109
    %v125 = vpack.c.b16 %v112, %v111
    %v126 = vpack.c.b16 %v114, %v113
    %v127 = vpack.c.b16 %v116, %v115
    %v128 = vpack.c.b16 %v118, %v117
    %v129 = vpack.c.b16 %v120, %v119
    %v130 = vpack.c.b16 %v122, %v121
    %v155 = vunpack.c.l.b16 %v75
    %v156 = vunpack.c.l.b16 %v76
    %v157 = vunpack.c.l.b16 %v77
    %v158 = vunpack.c.l.b16 %v78
    %v159 = vunpack.c.l.b16 %v79
    %v160 = vunpack.c.l.b16 %v80
    %v161 = vunpack.c.l.b16 %v81
    %v162 = vunpack.c.l.b16 %v82
    %v163 = vunpack.c.l.b16 %v83
    %v164 = vunpack.c.l.b16 %v84
    %v165 = vunpack.c.l.b16 %v85
    %v166 = vunpack.c.l.b16 %v86
    %v167 = vunpack.c.l.b16 %v87
    %v168 = vunpack.c.l.b16 %v88
    %v169 = vunpack.c.l.b16 %v89
    %v170 = vunpack.c.l.b16 %v90
    %v171 = vpack.c.b16 %v156, %v155
    %v172 = vpack.c.b16 %v158, %v157
    %v173 = vpack.c.b16 %v160, %v159
    %v174 = vpack.c.b16 %v162, %v161
    %v175 = vpack.c.b16 %v164, %v163
    %v176 = vpack.c.b16 %v166, %v165
    %v177 = vpack.c.b16 %v168, %v167
    %v178 = vpack.c.b16 %v170, %v169
    %187 = vmatprep.subr.bf16.mxu0 0
    %188 = vmatpush1.bf16.msra.mxu0 %v171
    %189 = vmatprep.subr.bf16.mxu0 0
    %190 = vmatpush1.bf16.msra.mxu0 %v172
    %191 = vmatprep.subr.bf16.mxu0 0
    %192 = vmatpush1.bf16.msra.mxu0 %v173
    %193 = vmatprep.subr.bf16.mxu0 0
    %194 = vmatpush1.bf16.msra.mxu0 %v174
    %195 = vmatprep.subr.bf16.mxu0 0
    %196 = vmatpush1.bf16.msra.mxu0 %v175
    %197 = vmatprep.subr.bf16.mxu0 0
    %198 = vmatpush1.bf16.msra.mxu0 %v176
    %199 = vmatprep.subr.bf16.mxu0 0
    %200 = vmatpush1.bf16.msra.mxu0 %v177
    %201 = vmatprep.subr.bf16.mxu0 0
    %202 = vmatpush1.bf16.msra.mxu0 %v178
    %203 = vmatprep.subr.bf16.mxu0 0
    %204 = vmatpush1.bf16.msra.mxu0 0
    %205 = vmatprep.subr.bf16.mxu0 0
    %206 = vmatpush1.bf16.msra.mxu0 0
    %207 = vmatprep.subr.bf16.mxu0 0
    %208 = vmatpush1.bf16.msra.mxu0 0
    %209 = vmatprep.subr.bf16.mxu0 0
    %210 = vmatpush1.bf16.msra.mxu0 0
    %211 = vmatprep.subr.bf16.mxu0 0
    %212 = vmatpush1.bf16.msra.mxu0 0
    %213 = vmatprep.subr.bf16.mxu0 0
    %214 = vmatpush1.bf16.msra.mxu0 0
    %215 = vmatprep.subr.bf16.mxu0 0
    %216 = vmatpush1.bf16.msra.mxu0 0
    %217 = vmatprep.subr.bf16.mxu0 0
    %218 = vmatpush1.bf16.msra.mxu0 0
    %219 = vmatprep.mubr.bf16.mxu0 0
    %220 = vmatmul.mubr.bf16.gmra.mrb[0].mxu0 %v123
    %v221 = vpop.f32.mrb[0].mxu0
    %v222 = vadd.f32 0.0, %v221
    %v223 = vpop.f32.mrb[0].mxu0
    %v224 = vpop.f32.mrb[0].mxu0
    %v225 = vadd.f32 0.0, %v224
    %v226 = vpop.f32.mrb[0].mxu0
    %227 = vmatprep.mubr.bf16.mxu0 0
    %228 = vmatmul.mubr.bf16.gmra.mrb[0].mxu0 %v124
    %v229 = vpop.f32.mrb[0].mxu0
    %v230 = vadd.f32 0.0, %v229
    %v231 = vpop.f32.mrb[0].mxu0
    %v232 = vpop.f32.mrb[0].mxu0
    %v233 = vadd.f32 0.0, %v232
    %v234 = vpop.f32.mrb[0].mxu0
    %235 = vmatprep.mubr.bf16.mxu0 0
    %236 = vmatmul.mubr.bf16.gmra.mrb[0].mxu0 %v125
    %v237 = vpop.f32.mrb[0].mxu0
    %v238 = vadd.f32 0.0, %v237
    %v239 = vpop.f32.mrb[0].mxu0
    %v240 = vpop.f32.mrb[0].mxu0
    %v241 = vadd.f32 0.0, %v240
    %v242 = vpop.f32.mrb[0].mxu0
    %243 = vmatprep.mubr.bf16.mxu0 0
    %244 = vmatmul.mubr.bf16.gmra.mrb[0].mxu0 %v126
    %v245 = vpop.f32.mrb[0].mxu0
    %v246 = vadd.f32 0.0, %v245
    %v247 = vpop.f32.mrb[0].mxu0
    %v248 = vpop.f32.mrb[0].mxu0
    %v249 = vadd.f32 0.0, %v248
    %v250 = vpop.f32.mrb[0].mxu0
    %251 = vmatprep.mubr.bf16.mxu0 0
    %252 = vmatmul.mubr.bf16.gmra.mrb[0].mxu0 %v127
    %v253 = vpop.f32.mrb[0].mxu0
    %v254 = vadd.f32 0.0, %v253
    %v255 = vpop.f32.mrb[0].mxu0
    %v256 = vpop.f32.mrb[0].mxu0
    %v257 = vadd.f32 0.0, %v256
    %v258 = vpop.f32.mrb[0].mxu0
    %259 = vmatprep.mubr.bf16.mxu0 0
    %260 = vmatmul.mubr.bf16.gmra.mrb[0].mxu0 %v128
    %v261 = vpop.f32.mrb[0].mxu0
    %v262 = vadd.f32 0.0, %v261
    %v263 = vpop.f32.mrb[0].mxu0
    %v264 = vpop.f32.mrb[0].mxu0
    %v265 = vadd.f32 0.0, %v264
    %v266 = vpop.f32.mrb[0].mxu0
    %267 = vmatprep.mubr.bf16.mxu0 0
    %268 = vmatmul.mubr.bf16.gmra.mrb[0].mxu0 %v129
    %v269 = vpop.f32.mrb[0].mxu0
    %v270 = vadd.f32 0.0, %v269
    %v271 = vpop.f32.mrb[0].mxu0
    %v272 = vpop.f32.mrb[0].mxu0
    %v273 = vadd.f32 0.0, %v272
    %v274 = vpop.f32.mrb[0].mxu0
    %275 = vmatprep.mubr.bf16.mxu0 0
    %276 = vmatmul.mubr.bf16.gmra.mrb[0].mxu0 %v130
    %v277 = vpop.f32.mrb[0].mxu0
    %v278 = vadd.f32 0.0, %v277
    %v279 = vpop.f32.mrb[0].mxu0
    %v280 = vpop.f32.mrb[0].mxu0
    %v281 = vadd.f32 0.0, %v280
    %v282 = vpop.f32.mrb[0].mxu0
    %283 = vdwg.mxu0
    %v284 = vpack.c.bf16 %v225, %v222
    %v285 = vpack.c.bf16 %v233, %v230
    %v286 = vpack.c.bf16 %v241, %v238
    %v287 = vpack.c.bf16 %v249, %v246
    %v288 = vpack.c.bf16 %v257, %v254
    %v289 = vpack.c.bf16 %v265, %v262
    %v290 = vpack.c.bf16 %v273, %v270
    %v291 = vpack.c.bf16 %v281, %v278
    %v292 = vld [vmem:[#allocation2] sm:$0xf]
    %v293 = vld [vmem:[#allocation2 + $0x4] sm:$0xf]
    %v294 = vld [vmem:[%s3] sm:$0x1]
    %v296 = vlaneseq
    %v297 = vshrl.u32 %v296, 7
    %v298 = vsub.s32 0, %v297
    %v299 = vrot.slane %v294, %v298
    %v303 = vunpack.c.l.b16 %v292
    %v304 = vunpack.c.l.b16 %v293
    %v305 = vpack.c.b16 %v304, %v303
    %vm307 = vcmask 130048
    %v309 = vsel %vm307, %v284, 0
    %v312 = vsel %vm307, %v285, 0
    %v315 = vsel %vm307, %v286, 0
    %v318 = vsel %vm307, %v287, 0
    %v321 = vsel %vm307, %v288, 0
    %v324 = vsel %vm307, %v289, 0
    %v327 = vsel %vm307, %v290, 0
    %v330 = vsel %vm307, %v291, 0
    %332 = vmatprep.subr.bf16.mxu0 0
    %333 = vmatpush1.bf16.msra.mxu0 %v305
    %334 = vmatprep.subr.bf16.mxu0 0
    %335 = vmatpush1.bf16.msra.mxu0 0
    %336 = vmatprep.subr.bf16.mxu0 0
    %337 = vmatpush1.bf16.msra.mxu0 0
    %338 = vmatprep.subr.bf16.mxu0 0
    %339 = vmatpush1.bf16.msra.mxu0 0
    %340 = vmatprep.subr.bf16.mxu0 0
    %341 = vmatpush1.bf16.msra.mxu0 0
    %342 = vmatprep.subr.bf16.mxu0 0
    %343 = vmatpush1.bf16.msra.mxu0 0
    %344 = vmatprep.subr.bf16.mxu0 0
    %345 = vmatpush1.bf16.msra.mxu0 0
    %346 = vmatprep.subr.bf16.mxu0 0
    %347 = vmatpush1.bf16.msra.mxu0 0
    %348 = vmatprep.subr.bf16.mxu0 0
    %349 = vmatpush1.bf16.msra.mxu0 0
    %350 = vmatprep.subr.bf16.mxu0 0
    %351 = vmatpush1.bf16.msra.mxu0 0
    %352 = vmatprep.subr.bf16.mxu0 0
    %353 = vmatpush1.bf16.msra.mxu0 0
    %354 = vmatprep.subr.bf16.mxu0 0
    %355 = vmatpush1.bf16.msra.mxu0 0
    %356 = vmatprep.subr.bf16.mxu0 0
    %357 = vmatpush1.bf16.msra.mxu0 0
    %358 = vmatprep.subr.bf16.mxu0 0
    %359 = vmatpush1.bf16.msra.mxu0 0
    %360 = vmatprep.subr.bf16.mxu0 0
    %361 = vmatpush1.bf16.msra.mxu0 0
    %362 = vmatprep.subr.bf16.mxu0 0
    %363 = vmatpush1.bf16.msra.mxu0 0
    %364 = vmatprep.mubr.bf16.mxu0 0
    %365 = vmatmul.mubr.bf16.gmra.mrb[0].mxu0 %v309
    %v366 = vpop.f32.mrb[0].mxu0
    %v367 = vadd.f32 %v299, %v366
    %v368 = vpop.f32.mrb[0].mxu0
    %v369 = vpop.f32.mrb[0].mxu0
    %v370 = vadd.f32 %v299, %v369
    %v371 = vpop.f32.mrb[0].mxu0
    %372 = vmatprep.mubr.bf16.mxu0 0
    %373 = vmatmul.mubr.bf16.gmra.mrb[0].mxu0 %v312
    %v374 = vpop.f32.mrb[0].mxu0
    %v375 = vadd.f32 %v299, %v374
    %v376 = vpop.f32.mrb[0].mxu0
    %v377 = vpop.f32.mrb[0].mxu0
    %v378 = vadd.f32 %v299, %v377
    %v379 = vpop.f32.mrb[0].mxu0
    %380 = vmatprep.mubr.bf16.mxu0 0
    %381 = vmatmul.mubr.bf16.gmra.mrb[0].mxu0 %v315
    %v382 = vpop.f32.mrb[0].mxu0
    %v383 = vadd.f32 %v299, %v382
    %v384 = vpop.f32.mrb[0].mxu0
    %v385 = vpop.f32.mrb[0].mxu0
    %v386 = vadd.f32 %v299, %v385
    %v387 = vpop.f32.mrb[0].mxu0
    %388 = vmatprep.mubr.bf16.mxu0 0
    %389 = vmatmul.mubr.bf16.gmra.mrb[0].mxu0 %v318
    %v390 = vpop.f32.mrb[0].mxu0
    %v391 = vadd.f32 %v299, %v390
    %v392 = vpop.f32.mrb[0].mxu0
    %v393 = vpop.f32.mrb[0].mxu0
    %v394 = vadd.f32 %v299, %v393
    %v395 = vpop.f32.mrb[0].mxu0
    %396 = vmatprep.mubr.bf16.mxu0 0
    %397 = vmatmul.mubr.bf16.gmra.mrb[0].mxu0 %v321
    %v398 = vpop.f32.mrb[0].mxu0
    %v399 = vadd.f32 %v299, %v398
    %v400 = vpop.f32.mrb[0].mxu0
    %v401 = vpop.f32.mrb[0].mxu0
    %v402 = vadd.f32 %v299, %v401
    %v403 = vpop.f32.mrb[0].mxu0
    %404 = vmatprep.mubr.bf16.mxu0 0
    %405 = vmatmul.mubr.bf16.gmra.mrb[0].mxu0 %v324
    %v406 = vpop.f32.mrb[0].mxu0
    %v407 = vadd.f32 %v299, %v406
    %v408 = vpop.f32.mrb[0].mxu0
    %v409 = vpop.f32.mrb[0].mxu0
    %v410 = vadd.f32 %v299, %v409
    %v411 = vpop.f32.mrb[0].mxu0
    %412 = vmatprep.mubr.bf16.mxu0 0
    %413 = vmatmul.mubr.bf16.gmra.mrb[0].mxu0 %v327
    %v414 = vpop.f32.mrb[0].mxu0
    %v415 = vadd.f32 %v299, %v414
    %v416 = vpop.f32.mrb[0].mxu0
    %v417 = vpop.f32.mrb[0].mxu0
    %v418 = vadd.f32 %v299, %v417
    %v419 = vpop.f32.mrb[0].mxu0
    %420 = vmatprep.mubr.bf16.mxu0 0
    %421 = vmatmul.mubr.bf16.gmra.mrb[0].mxu0 %v330
    %v422 = vpop.f32.mrb[0].mxu0
    %v423 = vadd.f32 %v299, %v422
    %v424 = vpop.f32.mrb[0].mxu0
    %v425 = vpop.f32.mrb[0].mxu0
    %v426 = vadd.f32 %v299, %v425
    %v427 = vpop.f32.mrb[0].mxu0
    %428 = vdwg.mxu0
    %v429 = vmax.f32 %v367, 0.0
    %v430 = vmax.f32 %v370, 0.0
    %v431 = vmax.f32 %v375, 0.0
    %v432 = vmax.f32 %v378, 0.0
    %v433 = vmax.f32 %v383, 0.0
    %v434 = vmax.f32 %v386, 0.0
    %v435 = vmax.f32 %v391, 0.0
    %v436 = vmax.f32 %v394, 0.0
    %v437 = vmax.f32 %v399, 0.0
    %v438 = vmax.f32 %v402, 0.0
    %v439 = vmax.f32 %v407, 0.0
    %v440 = vmax.f32 %v410, 0.0
    %v441 = vmax.f32 %v415, 0.0
    %v442 = vmax.f32 %v418, 0.0
    %v443 = vmax.f32 %v423, 0.0
    %v444 = vmax.f32 %v426, 0.0
    %v445 = vpack.c.bf16 %v430, %v429
    %v446 = vpack.c.bf16 %v432, %v431
    %v447 = vpack.c.bf16 %v434, %v433
    %v448 = vpack.c.bf16 %v436, %v435
    %v449 = vpack.c.bf16 %v438, %v437
    %v450 = vpack.c.bf16 %v440, %v439
    %v451 = vpack.c.bf16 %v442, %v441
    %v452 = vpack.c.bf16 %v444, %v443
    %v453 = vld [vmem:[%s4] sm:$0xf]
    %v454 = vld [vmem:[%s4 + $0x4] sm:$0xf]
    %v455 = vld [vmem:[%s4 + $0x8] sm:$0xf]
    %v456 = vld [vmem:[%s4 + $0xc] sm:$0xf]
    %v457 = vld [vmem:[%s4 + $0x10] sm:$0x3]
    %v463 = vunpack.c.l.b16 %v453
    %v464 = vunpack.c.l.b16 %v454
    %v465 = vunpack.c.l.b16 %v455
    %v466 = vunpack.c.l.b16 %v456
    %v467 = vunpack.c.l.b16 %v457
    %v468 = vpack.c.b16 %v464, %v463
    %v469 = vpack.c.b16 %v466, %v465
    %v470 = vpack.c.b16 %v467, %v467
    %vm473 = vcmask 293888
    %v475 = vsel %vm473, %v445, 0
    %v478 = vsel %vm473, %v446, 0
    %v481 = vsel %vm473, %v447, 0
    %v484 = vsel %vm473, %v448, 0
    %v487 = vsel %vm473, %v449, 0
    %v490 = vsel %vm473, %v450, 0
    %v493 = vsel %vm473, %v451, 0
    %v496 = vsel %vm473, %v452, 0
    %vm498 = vcmask 1041408
    %v500 = vsel %vm498, %v470, 0
    %502 = vmatprep.subr.bf16.mxu0 0
    %503 = vmatpush1.bf16.msra.mxu0 %v468
    %504 = vmatprep.subr.bf16.mxu0 0
    %505 = vmatpush1.bf16.msra.mxu0 %v469
    %506 = vmatprep.subr.bf16.mxu0 0
    %507 = vmatpush1.bf16.msra.mxu0 %v500
    %508 = vmatprep.subr.bf16.mxu0 0
    %509 = vmatpush1.bf16.msra.mxu0 0
    %510 = vmatprep.subr.bf16.mxu0 0
    %511 = vmatpush1.bf16.msra.mxu0 0
    %512 = vmatprep.subr.bf16.mxu0 0
    %513 = vmatpush1.bf16.msra.mxu0 0
    %514 = vmatprep.subr.bf16.mxu0 0
    %515 = vmatpush1.bf16.msra.mxu0 0
    %516 = vmatprep.subr.bf16.mxu0 0
    %517 = vmatpush1.bf16.msra.mxu0 0
    %518 = vmatprep.subr.bf16.mxu0 0
    %519 = vmatpush1.bf16.msra.mxu0 0
    %520 = vmatprep.subr.bf16.mxu0 0
    %521 = vmatpush1.bf16.msra.mxu0 0
    %522 = vmatprep.subr.bf16.mxu0 0
    %523 = vmatpush1.bf16.msra.mxu0 0
    %524 = vmatprep.subr.bf16.mxu0 0
    %525 = vmatpush1.bf16.msra.mxu0 0
    %526 = vmatprep.subr.bf16.mxu0 0
    %527 = vmatpush1.bf16.msra.mxu0 0
    %528 = vmatprep.subr.bf16.mxu0 0
    %529 = vmatpush1.bf16.msra.mxu0 0
    %530 = vmatprep.subr.bf16.mxu0 0
    %531 = vmatpush1.bf16.msra.mxu0 0
    %532 = vmatprep.subr.bf16.mxu0 0
    %533 = vmatpush1.bf16.msra.mxu0 0
    %534 = vmatprep.mubr.bf16.mxu0 0
    %535 = vmatmul.mubr.bf16.gmra.mrb[0].mxu0 %v475
    %v536 = vpop.f32.mrb[0].mxu0
    %v537 = vadd.f32 0.0, %v536
    %v538 = vpop.f32.mrb[0].mxu0
    %v539 = vpop.f32.mrb[0].mxu0
    %v540 = vadd.f32 0.0, %v539
    %v541 = vpop.f32.mrb[0].mxu0
    %542 = vmatprep.mubr.bf16.mxu0 0
    %543 = vmatmul.mubr.bf16.gmra.mrb[0].mxu0 %v478
    %v544 = vpop.f32.mrb[0].mxu0
    %v545 = vadd.f32 0.0, %v544
    %v546 = vpop.f32.mrb[0].mxu0
    %v547 = vpop.f32.mrb[0].mxu0
    %v548 = vadd.f32 0.0, %v547
    %v549 = vpop.f32.mrb[0].mxu0
    %550 = vmatprep.mubr.bf16.mxu0 0
    %551 = vmatmul.mubr.bf16.gmra.mrb[0].mxu0 %v481
    %v552 = vpop.f32.mrb[0].mxu0
    %v553 = vadd.f32 0.0, %v552
    %v554 = vpop.f32.mrb[0].mxu0
    %v555 = vpop.f32.mrb[0].mxu0
    %v556 = vadd.f32 0.0, %v555
    %v557 = vpop.f32.mrb[0].mxu0
    %558 = vmatprep.mubr.bf16.mxu0 0
    %559 = vmatmul.mubr.bf16.gmra.mrb[0].mxu0 %v484
    %v560 = vpop.f32.mrb[0].mxu0
    %v561 = vadd.f32 0.0, %v560
    %v562 = vpop.f32.mrb[0].mxu0
    %v563 = vpop.f32.mrb[0].mxu0
    %v564 = vadd.f32 0.0, %v563
    %v565 = vpop.f32.mrb[0].mxu0
    %566 = vmatprep.mubr.bf16.mxu0 0
    %567 = vmatmul.mubr.bf16.gmra.mrb[0].mxu0 %v487
    %v568 = vpop.f32.mrb[0].mxu0
    %v569 = vadd.f32 0.0, %v568
    %v570 = vpop.f32.mrb[0].mxu0
    %v571 = vpop.f32.mrb[0].mxu0
    %v572 = vadd.f32 0.0, %v571
    %v573 = vpop.f32.mrb[0].mxu0
    %574 = vmatprep.mubr.bf16.mxu0 0
    %575 = vmatmul.mubr.bf16.gmra.mrb[0].mxu0 %v490
    %v576 = vpop.f32.mrb[0].mxu0
    %v577 = vadd.f32 0.0, %v576
    %v578 = vpop.f32.mrb[0].mxu0
    %v579 = vpop.f32.mrb[0].mxu0
    %v580 = vadd.f32 0.0, %v579
    %v581 = vpop.f32.mrb[0].mxu0
    %582 = vmatprep.mubr.bf16.mxu0 0
    %583 = vmatmul.mubr.bf16.gmra.mrb[0].mxu0 %v493
    %v584 = vpop.f32.mrb[0].mxu0
    %v585 = vadd.f32 0.0, %v584
    %v586 = vpop.f32.mrb[0].mxu0
    %v587 = vpop.f32.mrb[0].mxu0
    %v588 = vadd.f32 0.0, %v587
    %v589 = vpop.f32.mrb[0].mxu0
    %590 = vmatprep.mubr.bf16.mxu0 0
    %591 = vmatmul.mubr.bf16.gmra.mrb[0].mxu0 %v496
    %v592 = vpop.f32.mrb[0].mxu0
    %v593 = vadd.f32 0.0, %v592
    %v594 = vpop.f32.mrb[0].mxu0
    %v595 = vpop.f32.mrb[0].mxu0
    %v596 = vadd.f32 0.0, %v595
    %v597 = vpop.f32.mrb[0].mxu0
    %598 = vdwg.mxu0
    %v599 = vpack.c.bf16 %v540, %v537
    %v600 = vpack.c.bf16 %v548, %v545
    %v601 = vpack.c.bf16 %v556, %v553
    %v602 = vpack.c.bf16 %v564, %v561
    %v603 = vpack.c.bf16 %v572, %v569
    %v604 = vpack.c.bf16 %v580, %v577
    %v605 = vpack.c.bf16 %v588, %v585
    %v606 = vpack.c.bf16 %v596, %v593
    %v607 = vld [vmem:[%s5] sm:$0x1]
    %v609 = vlaneseq
    %v610 = vshrl.u32 %v609, 7
    %v611 = vsub.s32 0, %v610
    %v612 = vrot.slane %v607, %v611
    %614 = vmatprep.subr.bf16.mxu0 0
    %615 = vmatpush1.bf16.msra.mxu0 %v599
    %616 = vmatprep.subr.bf16.mxu0 0
    %617 = vmatpush1.bf16.msra.mxu0 %v600
    %618 = vmatprep.subr.bf16.mxu0 0
    %619 = vmatpush1.bf16.msra.mxu0 %v601
    %620 = vmatprep.subr.bf16.mxu0 0
    %621 = vmatpush1.bf16.msra.mxu0 %v602
    %622 = vmatprep.subr.bf16.mxu0 0
    %623 = vmatpush1.bf16.msra.mxu0 %v603
    %624 = vmatprep.subr.bf16.mxu0 0
    %625 = vmatpush1.bf16.msra.mxu0 %v604
    %626 = vmatprep.subr.bf16.mxu0 0
    %627 = vmatpush1.bf16.msra.mxu0 %v605
    %628 = vmatprep.subr.bf16.mxu0 0
    %629 = vmatpush1.bf16.msra.mxu0 %v606
    %630 = vmatprep.subr.bf16.mxu0 0
    %631 = vmatpush1.bf16.msra.mxu0 0
    %632 = vmatprep.subr.bf16.mxu0 0
    %633 = vmatpush1.bf16.msra.mxu0 0
    %634 = vmatprep.subr.bf16.mxu0 0
    %635 = vmatpush1.bf16.msra.mxu0 0
    %636 = vmatprep.subr.bf16.mxu0 0
    %637 = vmatpush1.bf16.msra.mxu0 0
    %638 = vmatprep.subr.bf16.mxu0 0
    %639 = vmatpush1.bf16.msra.mxu0 0
    %640 = vmatprep.subr.bf16.mxu0 0
    %641 = vmatpush1.bf16.msra.mxu0 0
    %642 = vmatprep.subr.bf16.mxu0 0
    %643 = vmatpush1.bf16.msra.mxu0 0
    %644 = vmatprep.subr.bf16.mxu0 0
    %645 = vmatpush1.bf16.msra.mxu0 0
    %646 = vmatprep.mubr.bf16.mxu0 0
    %647 = vmatmul.mubr.bf16.gmra.mrb[0].mxu0 %v123
    %v648 = vpop.f32.mrb[0].mxu0
    %v649 = vadd.f32 %v612, %v648
    %v650 = vpop.f32.mrb[0].mxu0
    %v651 = vpop.f32.mrb[0].mxu0
    %v652 = vadd.f32 %v612, %v651
    %v653 = vpop.f32.mrb[0].mxu0
    %654 = vmatprep.mubr.bf16.mxu0 0
    %655 = vmatmul.mubr.bf16.gmra.mrb[0].mxu0 %v124
    %v656 = vpop.f32.mrb[0].mxu0
    %v657 = vadd.f32 %v612, %v656
    %v658 = vpop.f32.mrb[0].mxu0
    %v659 = vpop.f32.mrb[0].mxu0
    %v660 = vadd.f32 %v612, %v659
    %v661 = vpop.f32.mrb[0].mxu0
    %662 = vmatprep.mubr.bf16.mxu0 0
    %663 = vmatmul.mubr.bf16.gmra.mrb[0].mxu0 %v125
    %v664 = vpop.f32.mrb[0].mxu0
    %v665 = vadd.f32 %v612, %v664
    %v666 = vpop.f32.mrb[0].mxu0
    %v667 = vpop.f32.mrb[0].mxu0
    %v668 = vadd.f32 %v612, %v667
    %v669 = vpop.f32.mrb[0].mxu0
    %670 = vmatprep.mubr.bf16.mxu0 0
    %671 = vmatmul.mubr.bf16.gmra.mrb[0].mxu0 %v126
    %v672 = vpop.f32.mrb[0].mxu0
    %v673 = vadd.f32 %v612, %v672
    %v674 = vpop.f32.mrb[0].mxu0
    %v675 = vpop.f32.mrb[0].mxu0
    %v676 = vadd.f32 %v612, %v675
    %v677 = vpop.f32.mrb[0].mxu0
    %678 = vmatprep.mubr.bf16.mxu0 0
    %679 = vmatmul.mubr.bf16.gmra.mrb[0].mxu0 %v127
    %v680 = vpop.f32.mrb[0].mxu0
    %v681 = vadd.f32 %v612, %v680
    %v682 = vpop.f32.mrb[0].mxu0
    %v683 = vpop.f32.mrb[0].mxu0
    %v684 = vadd.f32 %v612, %v683
    %v685 = vpop.f32.mrb[0].mxu0
    %686 = vmatprep.mubr.bf16.mxu0 0
    %687 = vmatmul.mubr.bf16.gmra.mrb[0].mxu0 %v128
    %v688 = vpop.f32.mrb[0].mxu0
    %v689 = vadd.f32 %v612, %v688
    %v690 = vpop.f32.mrb[0].mxu0
    %v691 = vpop.f32.mrb[0].mxu0
    %v692 = vadd.f32 %v612, %v691
    %v693 = vpop.f32.mrb[0].mxu0
    %694 = vmatprep.mubr.bf16.mxu0 0
    %695 = vmatmul.mubr.bf16.gmra.mrb[0].mxu0 %v129
    %v696 = vpop.f32.mrb[0].mxu0
    %v697 = vadd.f32 %v612, %v696
    %v698 = vpop.f32.mrb[0].mxu0
    %v699 = vpop.f32.mrb[0].mxu0
    %v700 = vadd.f32 %v612, %v699
    %v701 = vpop.f32.mrb[0].mxu0
    %702 = vmatprep.mubr.bf16.mxu0 0
    %703 = vmatmul.mubr.bf16.gmra.mrb[0].mxu0 %v130
    %v704 = vpop.f32.mrb[0].mxu0
    %v705 = vadd.f32 %v612, %v704
    %v706 = vpop.f32.mrb[0].mxu0
    %v707 = vpop.f32.mrb[0].mxu0
    %v708 = vadd.f32 %v612, %v707
    %v709 = vpop.f32.mrb[0].mxu0
    %710 = vdwg.mxu0
    %v711 = vmax.f32 %v649, 0.0
    %v712 = vmax.f32 %v652, 0.0
    %v713 = vmax.f32 %v657, 0.0
    %v714 = vmax.f32 %v660, 0.0
    %v715 = vmax.f32 %v665, 0.0
    %v716 = vmax.f32 %v668, 0.0
    %v717 = vmax.f32 %v673, 0.0
    %v718 = vmax.f32 %v676, 0.0
    %v719 = vmax.f32 %v681, 0.0
    %v720 = vmax.f32 %v684, 0.0
    %v721 = vmax.f32 %v689, 0.0
    %v722 = vmax.f32 %v692, 0.0
    %v723 = vmax.f32 %v697, 0.0
    %v724 = vmax.f32 %v700, 0.0
    %v725 = vmax.f32 %v705, 0.0
    %v726 = vmax.f32 %v708, 0.0
    %v727 = vpack.c.bf16 %v712, %v711
    %v728 = vpack.c.bf16 %v714, %v713
    %v729 = vpack.c.bf16 %v716, %v715
    %v730 = vpack.c.bf16 %v718, %v717
    %v731 = vpack.c.bf16 %v720, %v719
    %v732 = vpack.c.bf16 %v722, %v721
    %v733 = vpack.c.bf16 %v724, %v723
    %v734 = vpack.c.bf16 %v726, %v725
    %735 = vmatprep.subr.bf16.mxu0 0
    %736 = vmatpush1.bf16.msra.mxu0 %v727
    %737 = vmatprep.subr.bf16.mxu0 0
    %738 = vmatpush1.bf16.msra.mxu0 %v728
    %739 = vmatprep.subr.bf16.mxu0 0
    %740 = vmatpush1.bf16.msra.mxu0 %v729
    %741 = vmatprep.subr.bf16.mxu0 0
    %742 = vmatpush1.bf16.msra.mxu0 %v730
    %743 = vmatprep.subr.bf16.mxu0 0
    %744 = vmatpush1.bf16.msra.mxu0 %v731
    %745 = vmatprep.subr.bf16.mxu0 0
    %746 = vmatpush1.bf16.msra.mxu0 %v732
    %747 = vmatprep.subr.bf16.mxu0 0
    %748 = vmatpush1.bf16.msra.mxu0 %v733
    %749 = vmatprep.subr.bf16.mxu0 0
    %750 = vmatpush1.bf16.msra.mxu0 %v734
    %751 = vmatprep.subr.bf16.mxu0 0
    %752 = vmatpush1.bf16.msra.mxu0 0
    %753 = vmatprep.subr.bf16.mxu0 0
    %754 = vmatpush1.bf16.msra.mxu0 0
    %755 = vmatprep.subr.bf16.mxu0 0
    %756 = vmatpush1.bf16.msra.mxu0 0
    %757 = vmatprep.subr.bf16.mxu0 0
    %758 = vmatpush1.bf16.msra.mxu0 0
    %759 = vmatprep.subr.bf16.mxu0 0
    %760 = vmatpush1.bf16.msra.mxu0 0
    %761 = vmatprep.subr.bf16.mxu0 0
    %762 = vmatpush1.bf16.msra.mxu0 0
    %763 = vmatprep.subr.bf16.mxu0 0
    %764 = vmatpush1.bf16.msra.mxu0 0
    %765 = vmatprep.subr.bf16.mxu0 0
    %766 = vmatpush1.bf16.msra.mxu0 0
    %767 = vmatprep.mubr.bf16.mxu0 0
    %768 = vmatmul.mubr.bf16.gmra.mrb[0].mxu0 %v123
    %v769 = vpop.f32.mrb[0].mxu0
    %v770 = vadd.f32 0.0, %v769
    %v771 = vpop.f32.mrb[0].mxu0
    %v772 = vpop.f32.mrb[0].mxu0
    %v773 = vadd.f32 0.0, %v772
    %v774 = vpop.f32.mrb[0].mxu0
    %775 = vmatprep.mubr.bf16.mxu0 0
    %776 = vmatmul.mubr.bf16.gmra.mrb[0].mxu0 %v124
    %v777 = vpop.f32.mrb[0].mxu0
    %v778 = vadd.f32 0.0, %v777
    %v779 = vpop.f32.mrb[0].mxu0
    %v780 = vpop.f32.mrb[0].mxu0
    %v781 = vadd.f32 0.0, %v780
    %v782 = vpop.f32.mrb[0].mxu0
    %783 = vmatprep.mubr.bf16.mxu0 0
    %784 = vmatmul.mubr.bf16.gmra.mrb[0].mxu0 %v125
    %v785 = vpop.f32.mrb[0].mxu0
    %v786 = vadd.f32 0.0, %v785
    %v787 = vpop.f32.mrb[0].mxu0
    %v788 = vpop.f32.mrb[0].mxu0
    %v789 = vadd.f32 0.0, %v788
    %v790 = vpop.f32.mrb[0].mxu0
    %791 = vmatprep.mubr.bf16.mxu0 0
    %792 = vmatmul.mubr.bf16.gmra.mrb[0].mxu0 %v126
    %v793 = vpop.f32.mrb[0].mxu0
    %v794 = vadd.f32 0.0, %v793
    %v795 = vpop.f32.mrb[0].mxu0
    %v796 = vpop.f32.mrb[0].mxu0
    %v797 = vadd.f32 0.0, %v796
    %v798 = vpop.f32.mrb[0].mxu0
    %799 = vmatprep.mubr.bf16.mxu0 0
    %800 = vmatmul.mubr.bf16.gmra.mrb[0].mxu0 %v127
    %v801 = vpop.f32.mrb[0].mxu0
    %v802 = vadd.f32 0.0, %v801
    %v803 = vpop.f32.mrb[0].mxu0
    %v804 = vpop.f32.mrb[0].mxu0
    %v805 = vadd.f32 0.0, %v804
    %v806 = vpop.f32.mrb[0].mxu0
    %807 = vmatprep.mubr.bf16.mxu0 0
    %808 = vmatmul.mubr.bf16.gmra.mrb[0].mxu0 %v128
    %v809 = vpop.f32.mrb[0].mxu0
    %v810 = vadd.f32 0.0, %v809
    %v811 = vpop.f32.mrb[0].mxu0
    %v812 = vpop.f32.mrb[0].mxu0
    %v813 = vadd.f32 0.0, %v812
    %v814 = vpop.f32.mrb[0].mxu0
    %815 = vmatprep.mubr.bf16.mxu0 0
    %816 = vmatmul.mubr.bf16.gmra.mrb[0].mxu0 %v129
    %v817 = vpop.f32.mrb[0].mxu0
    %v818 = vadd.f32 0.0, %v817
    %v819 = vpop.f32.mrb[0].mxu0
    %v820 = vpop.f32.mrb[0].mxu0
    %v821 = vadd.f32 0.0, %v820
    %v822 = vpop.f32.mrb[0].mxu0
    %823 = vmatprep.mubr.bf16.mxu0 0
    %824 = vmatmul.mubr.bf16.gmra.mrb[0].mxu0 %v130
    %v825 = vpop.f32.mrb[0].mxu0
    %v826 = vadd.f32 0.0, %v825
    %v827 = vpop.f32.mrb[0].mxu0
    %v828 = vpop.f32.mrb[0].mxu0
    %v829 = vadd.f32 0.0, %v828
    %v830 = vpop.f32.mrb[0].mxu0
    %831 = vdwg.mxu0
    %v832 = vpack.c.bf16 %v773, %v770
    %v833 = vpack.c.bf16 %v781, %v778
    %v834 = vpack.c.bf16 %v789, %v786
    %v835 = vpack.c.bf16 %v797, %v794
    %v836 = vpack.c.bf16 %v805, %v802
    %v837 = vpack.c.bf16 %v813, %v810
    %v838 = vpack.c.bf16 %v821, %v818
    %v839 = vpack.c.bf16 %v829, %v826
    %v840 = vld [vmem:[#allocation5] sm:$0xf]
    %v841 = vld [vmem:[#allocation5 + $0x4] sm:$0xf]
    %v842 = vld [vmem:[#allocation5 + $0x8] sm:$0xf]
    %v843 = vld [vmem:[#allocation5 + $0xc] sm:$0xf]
    %v844 = vld [vmem:[#allocation5 + $0x10] sm:$0x3]
    %v845 = vld [vmem:[%s7] sm:$0x1]
    %v847 = vlaneseq
    %v848 = vshrl.u32 %v847, 7
    %v849 = vsub.s32 0, %v848
    %v850 = vrot.slane %v845, %v849
    %v857 = vunpack.c.l.b16 %v840
    %v858 = vunpack.c.l.b16 %v841
    %v859 = vunpack.c.l.b16 %v842
    %v860 = vunpack.c.l.b16 %v843
    %v861 = vunpack.c.l.b16 %v844
    %v862 = vpack.c.b16 %v858, %v857
    %v863 = vpack.c.b16 %v860, %v859
    %v864 = vpack.c.b16 %v861, %v861
    %v868 = vsel %vm473, %v832, 0
    %v871 = vsel %vm473, %v833, 0
    %v874 = vsel %vm473, %v834, 0
    %v877 = vsel %vm473, %v835, 0
    %v880 = vsel %vm473, %v836, 0
    %v883 = vsel %vm473, %v837, 0
    %v886 = vsel %vm473, %v838, 0
    %v889 = vsel %vm473, %v839, 0
    %v892 = vsel %vm498, %v864, 0
    %894 = vmatprep.subr.bf16.mxu0 0
    %895 = vmatpush1.bf16.msra.mxu0 %v862
    %896 = vmatprep.subr.bf16.mxu0 0
    %897 = vmatpush1.bf16.msra.mxu0 %v863
    %898 = vmatprep.subr.bf16.mxu0 0
    %899 = vmatpush1.bf16.msra.mxu0 %v892
    %900 = vmatprep.subr.bf16.mxu0 0
    %901 = vmatpush1.bf16.msra.mxu0 0
    %902 = vmatprep.subr.bf16.mxu0 0
    %903 = vmatpush1.bf16.msra.mxu0 0
    %904 = vmatprep.subr.bf16.mxu0 0
    %905 = vmatpush1.bf16.msra.mxu0 0
    %906 = vmatprep.subr.bf16.mxu0 0
    %907 = vmatpush1.bf16.msra.mxu0 0
    %908 = vmatprep.subr.bf16.mxu0 0
    %909 = vmatpush1.bf16.msra.mxu0 0
    %910 = vmatprep.subr.bf16.mxu0 0
    %911 = vmatpush1.bf16.msra.mxu0 0
    %912 = vmatprep.subr.bf16.mxu0 0
    %913 = vmatpush1.bf16.msra.mxu0 0
    %914 = vmatprep.subr.bf16.mxu0 0
    %915 = vmatpush1.bf16.msra.mxu0 0
    %916 = vmatprep.subr.bf16.mxu0 0
    %917 = vmatpush1.bf16.msra.mxu0 0
    %918 = vmatprep.subr.bf16.mxu0 0
    %919 = vmatpush1.bf16.msra.mxu0 0
    %920 = vmatprep.subr.bf16.mxu0 0
    %921 = vmatpush1.bf16.msra.mxu0 0
    %922 = vmatprep.subr.bf16.mxu0 0
    %923 = vmatpush1.bf16.msra.mxu0 0
    %924 = vmatprep.subr.bf16.mxu0 0
    %925 = vmatpush1.bf16.msra.mxu0 0
    %926 = vmatprep.mubr.bf16.mxu0 0
    %927 = vmatmul.mubr.bf16.gmra.mrb[0].mxu0 %v868
    %v928 = vpop.f32.mrb[0].mxu0
    %v929 = vadd.f32 %v850, %v928
    %v930 = vpop.f32.mrb[0].mxu0
    %v931 = vpop.f32.mrb[0].mxu0
    %v932 = vadd.f32 %v850, %v931
    %v933 = vpop.f32.mrb[0].mxu0
    %934 = vmatprep.mubr.bf16.mxu0 0
    %935 = vmatmul.mubr.bf16.gmra.mrb[0].mxu0 %v871
    %v936 = vpop.f32.mrb[0].mxu0
    %v937 = vadd.f32 %v850, %v936
    %v938 = vpop.f32.mrb[0].mxu0
    %v939 = vpop.f32.mrb[0].mxu0
    %v940 = vadd.f32 %v850, %v939
    %v941 = vpop.f32.mrb[0].mxu0
    %942 = vmatprep.mubr.bf16.mxu0 0
    %943 = vmatmul.mubr.bf16.gmra.mrb[0].mxu0 %v874
    %v944 = vpop.f32.mrb[0].mxu0
    %v945 = vadd.f32 %v850, %v944
    %v946 = vpop.f32.mrb[0].mxu0
    %v947 = vpop.f32.mrb[0].mxu0
    %v948 = vadd.f32 %v850, %v947
    %v949 = vpop.f32.mrb[0].mxu0
    %950 = vmatprep.mubr.bf16.mxu0 0
    %951 = vmatmul.mubr.bf16.gmra.mrb[0].mxu0 %v877
    %v952 = vpop.f32.mrb[0].mxu0
    %v953 = vadd.f32 %v850, %v952
    %v954 = vpop.f32.mrb[0].mxu0
    %v955 = vpop.f32.mrb[0].mxu0
    %v956 = vadd.f32 %v850, %v955
    %v957 = vpop.f32.mrb[0].mxu0
    %958 = vmatprep.mubr.bf16.mxu0 0
    %959 = vmatmul.mubr.bf16.gmra.mrb[0].mxu0 %v880
    %v960 = vpop.f32.mrb[0].mxu0
    %v961 = vadd.f32 %v850, %v960
    %v962 = vpop.f32.mrb[0].mxu0
    %v963 = vpop.f32.mrb[0].mxu0
    %v964 = vadd.f32 %v850, %v963
    %v965 = vpop.f32.mrb[0].mxu0
    %966 = vmatprep.mubr.bf16.mxu0 0
    %967 = vmatmul.mubr.bf16.gmra.mrb[0].mxu0 %v883
    %v968 = vpop.f32.mrb[0].mxu0
    %v969 = vadd.f32 %v850, %v968
    %v970 = vpop.f32.mrb[0].mxu0
    %v971 = vpop.f32.mrb[0].mxu0
    %v972 = vadd.f32 %v850, %v971
    %v973 = vpop.f32.mrb[0].mxu0
    %974 = vmatprep.mubr.bf16.mxu0 0
    %975 = vmatmul.mubr.bf16.gmra.mrb[0].mxu0 %v886
    %v976 = vpop.f32.mrb[0].mxu0
    %v977 = vadd.f32 %v850, %v976
    %v978 = vpop.f32.mrb[0].mxu0
    %v979 = vpop.f32.mrb[0].mxu0
    %v980 = vadd.f32 %v850, %v979
    %v981 = vpop.f32.mrb[0].mxu0
    %982 = vmatprep.mubr.bf16.mxu0 0
    %983 = vmatmul.mubr.bf16.gmra.mrb[0].mxu0 %v889
    %v984 = vpop.f32.mrb[0].mxu0
    %v985 = vadd.f32 %v850, %v984
    %v986 = vpop.f32.mrb[0].mxu0
    %v987 = vpop.f32.mrb[0].mxu0
    %v988 = vadd.f32 %v850, %v987
    %v989 = vpop.f32.mrb[0].mxu0
    %990 = vdwg.mxu0
    %991 = vmax.xlane.f32.xlu0 %v929
    %v992 = vpop.xlane.xlu0 %991
    %993 = vmax.xlane.f32.xlu0 %v932
    %v994 = vpop.xlane.xlu0 %993
    %995 = vmax.xlane.f32.xlu0 %v937
    %v996 = vpop.xlane.xlu0 %995
    %997 = vmax.xlane.f32.xlu0 %v940
    %v998 = vpop.xlane.xlu0 %997
    %999 = vmax.xlane.f32.xlu0 %v945
    %v1000 = vpop.xlane.xlu0 %999
    %1001 = vmax.xlane.f32.xlu0 %v948
    %v1002 = vpop.xlane.xlu0 %1001
    %1003 = vmax.xlane.f32.xlu0 %v953
    %v1004 = vpop.xlane.xlu0 %1003
    %1005 = vmax.xlane.f32.xlu0 %v956
    %v1006 = vpop.xlane.xlu0 %1005
    %1007 = vmax.xlane.f32.xlu0 %v961
    %v1008 = vpop.xlane.xlu0 %1007
    %1009 = vmax.xlane.f32.xlu0 %v964
    %v1010 = vpop.xlane.xlu0 %1009
    %1011 = vmax.xlane.f32.xlu0 %v969
    %v1012 = vpop.xlane.xlu0 %1011
    %1013 = vmax.xlane.f32.xlu0 %v972
    %v1014 = vpop.xlane.xlu0 %1013
    %1015 = vmax.xlane.f32.xlu0 %v977
    %v1016 = vpop.xlane.xlu0 %1015
    %1017 = vmax.xlane.f32.xlu0 %v980
    %v1018 = vpop.xlane.xlu0 %1017
    %1019 = vmax.xlane.f32.xlu0 %v985
    %v1020 = vpop.xlane.xlu0 %1019
    %1021 = vmax.xlane.f32.xlu0 %v988
    %v1022 = vpop.xlane.xlu0 %1021
    %v1023 = vsub.f32 %v929, %v992
    %v1024 = vsub.f32 %v932, %v994
    %v1025 = vsub.f32 %v937, %v996
    %v1026 = vsub.f32 %v940, %v998
    %v1027 = vsub.f32 %v945, %v1000
    %v1028 = vsub.f32 %v948, %v1002
    %v1029 = vsub.f32 %v953, %v1004
    %v1030 = vsub.f32 %v956, %v1006
    %v1031 = vsub.f32 %v961, %v1008
    %v1032 = vsub.f32 %v964, %v1010
    %v1033 = vsub.f32 %v969, %v1012
    %v1034 = vsub.f32 %v972, %v1014
    %v1035 = vsub.f32 %v977, %v1016
    %v1036 = vsub.f32 %v980, %v1018
    %v1037 = vsub.f32 %v985, %v1020
    %v1038 = vsub.f32 %v988, %v1022
    %v1039 = vmul.f32 %v1023, 1.442695
    %v1040 = vpow.pop %v1039
    %v1041 = vmul.f32 %v1024, 1.442695
    %v1042 = vpow.pop %v1041
    %v1043 = vmul.f32 %v1025, 1.442695
    %v1044 = vpow.pop %v1043
    %v1045 = vmul.f32 %v1026, 1.442695
    %v1046 = vpow.pop %v1045
    %v1047 = vmul.f32 %v1027, 1.442695
    %v1048 = vpow.pop %v1047
    %v1049 = vmul.f32 %v1028, 1.442695
    %v1050 = vpow.pop %v1049
    %v1051 = vmul.f32 %v1029, 1.442695
    %v1052 = vpow.pop %v1051
    %v1053 = vmul.f32 %v1030, 1.442695
    %v1054 = vpow.pop %v1053
    %v1055 = vmul.f32 %v1031, 1.442695
    %v1056 = vpow.pop %v1055
    %v1057 = vmul.f32 %v1032, 1.442695
    %v1058 = vpow.pop %v1057
    %v1059 = vmul.f32 %v1033, 1.442695
    %v1060 = vpow.pop %v1059
    %v1061 = vmul.f32 %v1034, 1.442695
    %v1062 = vpow.pop %v1061
    %v1063 = vmul.f32 %v1035, 1.442695
    %v1064 = vpow.pop %v1063
    %v1065 = vmul.f32 %v1036, 1.442695
    %v1066 = vpow.pop %v1065
    %v1067 = vmul.f32 %v1037, 1.442695
    %v1068 = vpow.pop %v1067
    %v1069 = vmul.f32 %v1038, 1.442695
    %v1070 = vpow.pop %v1069
    %1071 = vadd.xlane.f32.xlu0 %v1040
    %v1072 = vpop.xlane.xlu0 %1071
    %1073 = vadd.xlane.f32.xlu0 %v1042
    %v1074 = vpop.xlane.xlu0 %1073
    %1075 = vadd.xlane.f32.xlu0 %v1044
    %v1076 = vpop.xlane.xlu0 %1075
    %1077 = vadd.xlane.f32.xlu0 %v1046
    %v1078 = vpop.xlane.xlu0 %1077
    %1079 = vadd.xlane.f32.xlu0 %v1048
    %v1080 = vpop.xlane.xlu0 %1079
    %1081 = vadd.xlane.f32.xlu0 %v1050
    %v1082 = vpop.xlane.xlu0 %1081
    %1083 = vadd.xlane.f32.xlu0 %v1052
    %v1084 = vpop.xlane.xlu0 %1083
    %1085 = vadd.xlane.f32.xlu0 %v1054
    %v1086 = vpop.xlane.xlu0 %1085
    %1087 = vadd.xlane.f32.xlu0 %v1056
    %v1088 = vpop.xlane.xlu0 %1087
    %1089 = vadd.xlane.f32.xlu0 %v1058
    %v1090 = vpop.xlane.xlu0 %1089
    %1091 = vadd.xlane.f32.xlu0 %v1060
    %v1092 = vpop.xlane.xlu0 %1091
    %1093 = vadd.xlane.f32.xlu0 %v1062
    %v1094 = vpop.xlane.xlu0 %1093
    %1095 = vadd.xlane.f32.xlu0 %v1064
    %v1096 = vpop.xlane.xlu0 %1095
    %1097 = vadd.xlane.f32.xlu0 %v1066
    %v1098 = vpop.xlane.xlu0 %1097
    %1099 = vadd.xlane.f32.xlu0 %v1068
    %v1100 = vpop.xlane.xlu0 %1099
    %1101 = vadd.xlane.f32.xlu0 %v1070
    %v1102 = vpop.xlane.xlu0 %1101
    %v1103 = vrcp.pop %v1072
    %v1104 = vrcp.pop %v1074
    %v1105 = vrcp.pop %v1076
    %v1106 = vrcp.pop %v1078
    %v1107 = vrcp.pop %v1080
    %v1108 = vrcp.pop %v1082
    %v1109 = vrcp.pop %v1084
    %v1110 = vrcp.pop %v1086
    %v1111 = vrcp.pop %v1088
    %v1112 = vrcp.pop %v1090
    %v1113 = vrcp.pop %v1092
    %v1114 = vrcp.pop %v1094
    %v1115 = vrcp.pop %v1096
    %v1116 = vrcp.pop %v1098
    %v1117 = vrcp.pop %v1100
    %v1118 = vrcp.pop %v1102
    %v1119 = vmul.f32 %v1040, %v1103
    %v1120 = vmul.f32 %v1042, %v1104
    %v1121 = vmul.f32 %v1044, %v1105
    %v1122 = vmul.f32 %v1046, %v1106
    %v1123 = vmul.f32 %v1048, %v1107
    %v1124 = vmul.f32 %v1050, %v1108
    %v1125 = vmul.f32 %v1052, %v1109
    %v1126 = vmul.f32 %v1054, %v1110
    %v1127 = vmul.f32 %v1056, %v1111
    %v1128 = vmul.f32 %v1058, %v1112
    %v1129 = vmul.f32 %v1060, %v1113
    %v1130 = vmul.f32 %v1062, %v1114
    %v1131 = vmul.f32 %v1064, %v1115
    %v1132 = vmul.f32 %v1066, %v1116
    %v1133 = vmul.f32 %v1068, %v1117
    %v1134 = vmul.f32 %v1070, %v1118
    %1135 = vst [vmem:[#allocation7] sm:$0xff] %v1119
    %1136 = vst [vmem:[#allocation7 + $0x8] sm:$0xff] %v1120
    %1137 = vst [vmem:[#allocation7 + $0x10] sm:$0xff] %v1121
    %1138 = vst [vmem:[#allocation7 + $0x18] sm:$0xff] %v1122
    %1139 = vst [vmem:[#allocation7 + $0x20] sm:$0xff] %v1123
    %1140 = vst [vmem:[#allocation7 + $0x28] sm:$0xff] %v1124
    %1141 = vst [vmem:[#allocation7 + $0x30] sm:$0xff] %v1125
    %1142 = vst [vmem:[#allocation7 + $0x38] sm:$0xff] %v1126
    %1143 = vst [vmem:[#allocation7 + $0x40] sm:$0xff] %v1127
    %1144 = vst [vmem:[#allocation7 + $0x48] sm:$0xff] %v1128
    %1145 = vst [vmem:[#allocation7 + $0x50] sm:$0xff] %v1129
    %1146 = vst [vmem:[#allocation7 + $0x58] sm:$0xff] %v1130
    %1147 = vst [vmem:[#allocation7 + $0x60] sm:$0xff] %v1131
    %1148 = vst [vmem:[#allocation7 + $0x68] sm:$0xff] %v1132
    %1149 = vst [vmem:[#allocation7 + $0x70] sm:$0xff] %v1133
    %1150 = vst [vmem:[#allocation7 + $0x78] sm:$0xff] %v1134
    // Predicated region
    $region42: #{tpu_custom_call.1} parent=1 // pred_check
      _
    $region43: #{tpu_custom_call.1} parent=1 // pred_check_branch
      %1152 = sbr.rel (0) target = $region45
    $region44: #{tpu_custom_call.1} parent=1 // pred_region
      %s1154 = ssub.s32 2048, 2048
      %1155 = vsyncadd [#allocation4], %s1154
      %s1156 = sshll.u32 [#allocation7], 4
      %s1157 = int_to_ptr.vmem [resolvable:$true] %s1156
      %1162 = dma.vmem_to_hbm [thread:$0]  %s1157, 2048, %s8, [#allocation4], 128, 128, 8
    $region45: #{tpu_custom_call.1} parent=1 // pred_fallthru
      _
    // Predicated region
    $region46: #{tpu_custom_call.1} parent=1 // pred_check
      _
    $region47: #{tpu_custom_call.1} parent=1 // pred_check_branch
      %1164 = sbr.rel (0) target = $region49
    $region48: #{tpu_custom_call.1} parent=1 // pred_region
      %1165 = dma.done [#allocation4], 2048
    $region49: #{tpu_custom_call.1} parent=1 // pred_fallthru
      _
    %1166 = vsyncpa [#allocation3], 1
    %1167 = vsyncpa [#allocation6], 1
    %1168 = vsyncpa [#allocation4], 1

</llo_original>
